<compile_context>
chip_gen: v7x
topology: tpu7x:2x2x1
jax: 0.10.0
libtpu: 0.0.40
codegen_flags: <defaults>
</compile_context>

<pallas_src>
import jax
import jax.numpy as jnp
from jax.experimental import pallas as pl
from jax.experimental.pallas import tpu as pltpu


def conv3x3_relu6_kernel(x_ref, w_ref, b_ref, o_ref):
    # x_ref: (Mt, 3*W*Cin)      bf16  kh-stacked, H-padded input rows
    # w_ref: (3*W*Cin, W*Cout)  bf16  block-banded weights (kw taps + W padding)
    # b_ref: (1, W*Cout)        f32   bias tiled along W
    # o_ref: (Mt, W*Cout)       f32   lane-dense output rows
    y = jnp.dot(x_ref[...], w_ref[...], preferred_element_type=jnp.float32)
    y = y + b_ref[...]                                     # f32 epilogue
    o_ref[...] = jnp.clip(y, 0.0, 6.0).astype(o_ref.dtype)  # ReLU6


def _banded_weights(weight_oihw, W, dtype):
    """kh-stacked block-banded weight matrix encoding kw taps and W zero padding.

    wstk[kh*W*Cin + jp*Cin + c, j*Cout + o] = weight[o, c, kh, jp - j + 1]
                                              if |jp - j| <= 1 else 0
    """
    w_hwio = jnp.transpose(weight_oihw, (2, 3, 1, 0))      # (3, 3, Cin, Cout)
    # S_kw[jp, j] = 1 iff jp == j + kw - 1 (band clipping == zero padding in W)
    shifts = [jnp.eye(W, k=1, dtype=w_hwio.dtype),         # kw = 0 -> jp = j - 1
              jnp.eye(W, k=0, dtype=w_hwio.dtype),         # kw = 1 -> jp = j
              jnp.eye(W, k=-1, dtype=w_hwio.dtype)]        # kw = 2 -> jp = j + 1
    bands = [sum(jnp.kron(shifts[kw], w_hwio[kh, kw]) for kw in range(3))
             for kh in range(3)]
    return jnp.concatenate(bands, axis=0).astype(dtype)    # (3*W*Cin, W*Cout)


def _pick_row_tile(m):
    # Largest sublane-friendly divisor of m, capped at 256 rows so the live
    # (row_tile, W*Cout) f32 accumulator stays comfortably within the vregs.
    for t in (256, 128, 64, 32, 16, 8):
        if m % t == 0:
            return t
    return m  # tiny / odd row counts: single full-extent block


def m_conv_forward(x_nchw, weight_oihw, bias):
    """Fused Conv2d(k=3, pad=1, stride=1) + ReLU6 (PyTorch M_Conv forward)."""
    B, Cin, H, W = x_nchw.shape
    Cout = weight_oihw.shape[0]
    compute_dtype = jnp.bfloat16

    # NCHW -> (B, H, W*Cin) with Cin minor on the lane axis, cast to bf16.
    x_flat = (jnp.transpose(x_nchw, (0, 2, 3, 1))
              .reshape(B, H, W * Cin).astype(compute_dtype))
    # Wrapper-side H zero padding (replaces the in-kernel halo scratch).
    x_pad = jnp.pad(x_flat, ((0, 0), (1, 1), (0, 0)))
    # Stack the 3 kh row-windows along the lane axis and fold batch into rows:
    # x_stacked[b*H + i, kh*W*Cin + jp*Cin + c] = x[b, i + kh - 1, jp, c]
    x_stacked = jnp.concatenate([x_pad[:, kh:kh + H, :] for kh in range(3)],
                                axis=-1).reshape(B * H, 3 * W * Cin)

    w_stacked = _banded_weights(weight_oihw, W, compute_dtype)  # (3*W*Cin, W*Cout)
    bias_tiled = jnp.tile(bias.astype(jnp.float32), W).reshape(1, W * Cout)

    M = B * H
    row_tile = _pick_row_tile(M)
    n_rows = M // row_tile

    out_flat = pl.pallas_call(
        conv3x3_relu6_kernel,
        out_shape=jax.ShapeDtypeStruct((M, W * Cout), jnp.float32),
        grid=(n_rows,),
        in_specs=[
            pl.BlockSpec((row_tile, 3 * W * Cin), lambda i: (i, 0)),
            pl.BlockSpec((3 * W * Cin, W * Cout), lambda i: (0, 0)),
            pl.BlockSpec((1, W * Cout), lambda i: (0, 0)),
        ],
        out_specs=pl.BlockSpec((row_tile, W * Cout), lambda i: (i, 0)),
        compiler_params=pltpu.CompilerParams(
            dimension_semantics=("parallel",)),
    )(x_stacked, w_stacked, bias_tiled)

    # (B*H, W*Cout) -> (B, H, W, Cout) -> NCHW (module semantics)
    out = out_flat.reshape(B, H, W, Cout)
    return jnp.transpose(out, (0, 3, 1, 2)).astype(x_nchw.dtype)


def _reference(x_nchw, weight_oihw, bias):
    out = jax.lax.conv_general_dilated(
        x_nchw, weight_oihw, window_strides=(1, 1), padding=((1, 1), (1, 1)),
        dimension_numbers=("NCHW", "OIHW", "NCHW"))
    out = out + bias[None, :, None, None]
    return jnp.clip(out, 0.0, 6.0)


if __name__ == "__main__":
    B, Cin, Cout, H, W = 2, 4, 8, 16, 16

    key = jax.random.PRNGKey(0)
    kx, kw_, kb = jax.random.split(key, 3)

    x = jax.random.normal(kx, (B, Cin, H, W), jnp.float32)
    # Deterministic parameter init (Kaiming-uniform-ish scale, like PyTorch).
    fan_in = Cin * 3 * 3
    bound = 1.0 / (fan_in ** 0.5)
    weight = jax.random.uniform(kw_, (Cout, Cin, 3, 3), jnp.float32,
                                minval=-bound, maxval=bound)
    bias = jax.random.uniform(kb, (Cout,), jnp.float32,
                              minval=-bound, maxval=bound)

    fwd = jax.jit(m_conv_forward)
    out = jax.block_until_ready(fwd(x, weight, bias))
    assert out.shape == (B, Cout, H, W)

    # Reference on the same bf16-rounded operands (the kernel feeds bf16 to the
    # MXU and accumulates in f32), plus a looser sanity check vs full f32.
    x_r = x.astype(jnp.bfloat16).astype(jnp.float32)
    w_r = weight.astype(jnp.bfloat16).astype(jnp.float32)
    ref_bf16 = _reference(x_r, w_r, bias)
    ref_f32 = _reference(x, weight, bias)
    assert jnp.allclose(out, ref_bf16, atol=2e-4, rtol=2e-4)
    assert jnp.allclose(out, ref_f32, atol=5e-2, rtol=5e-2)

    print("KERNEL_OK")
</pallas_src>

<mosaic_0001>
module attributes {stable_mosaic.version = 11 : i64} {
  func.func @conv3x3_relu6_kernel(%arg0: i32, %arg1: memref<32x192xbf16, #tpu.memory_space<vmem>>, %arg2: memref<192x128xbf16, #tpu.memory_space<vmem>>, %arg3: memref<1x128xf32, #tpu.memory_space<vmem>>, %arg4: memref<32x128xf32, #tpu.memory_space<vmem>>) attributes {dimension_semantics = [#tpu.dimension_semantics<parallel>], iteration_bounds = array<i64: 1>, scalar_prefetch = 0 : i64, scratch_operands = 0 : i64, tpu.core_type = #tpu.core_type<tc>, window_params = [{transform_indices = @transform_0, window_bounds = array<i64: 32, 192>}, {pipeline_mode = #tpu.pipeline_mode<synchronous>, transform_indices = @transform_1, window_bounds = array<i64: 192, 128>}, {pipeline_mode = #tpu.pipeline_mode<synchronous>, transform_indices = @transform_2, window_bounds = array<i64: 1, 128>}, {transform_indices = @transform_3, window_bounds = array<i64: 32, 128>}]} {
    %c0 = arith.constant 0 : index
    %c0_0 = arith.constant 0 : index
    %0 = vector.load %arg1[%c0, %c0_0] : memref<32x192xbf16, #tpu.memory_space<vmem>>, vector<32x192xbf16>
    %c0_1 = arith.constant 0 : index
    %c0_2 = arith.constant 0 : index
    %1 = vector.load %arg2[%c0_1, %c0_2] : memref<192x128xbf16, #tpu.memory_space<vmem>>, vector<192x128xbf16>
    %cst = arith.constant dense<0.000000e+00> : vector<32x128xf32>
    %2 = tpu.matmul %0, %1, %cst {dimension_numbers = #tpu.dot_dimension_numbers<[1], [0], [0], [1], [0, 0, 1, 1], [], []>} : vector<32x192xbf16>, vector<192x128xbf16>, vector<32x128xf32> -> vector<32x128xf32>
    %c0_3 = arith.constant 0 : index
    %c0_4 = arith.constant 0 : index
    %3 = vector.load %arg3[%c0_3, %c0_4] : memref<1x128xf32, #tpu.memory_space<vmem>>, vector<1x128xf32>
    %4 = vector.broadcast %3 : vector<1x128xf32> to vector<32x128xf32>
    %5 = arith.addf %2, %4 : vector<32x128xf32>
    %cst_5 = arith.constant 0.000000e+00 : f32
    %cst_6 = arith.constant 6.000000e+00 : f32
    %6 = vector.broadcast %cst_5 : f32 to vector<32x128xf32>
    %7 = arith.maximumf %6, %5 : vector<32x128xf32>
    %8 = vector.broadcast %cst_6 : f32 to vector<32x128xf32>
    %9 = arith.minimumf %8, %7 : vector<32x128xf32>
    %c0_7 = arith.constant 0 : index
    %c0_8 = arith.constant 0 : index
    %10 = vector.load %arg4[%c0_7, %c0_8] : memref<32x128xf32, #tpu.memory_space<vmem>>, vector<32x128xf32>
    tpu.vector_store %arg4[%c0_7, %c0_8], %9 {strides = array<i32>} : memref<32x128xf32, #tpu.memory_space<vmem>>, vector<32x128xf32>,
    return
  }
  func.func @transform_0(%arg0: i32) -> (i32, i32) {
    %c0_i32 = arith.constant 0 : i32
    %c0_i32_0 = arith.constant 0 : i32
    return %arg0, %c0_i32 : i32, i32
  }
  func.func @transform_1(%arg0: i32) -> (i32, i32) {
    %c0_i32 = arith.constant 0 : i32
    %c0_i32_0 = arith.constant 0 : i32
    %c0_i32_1 = arith.constant 0 : i32
    return %c0_i32, %c0_i32_0 : i32, i32
  }
  func.func @transform_2(%arg0: i32) -> (i32, i32) {
    %c0_i32 = arith.constant 0 : i32
    %c0_i32_0 = arith.constant 0 : i32
    %c0_i32_1 = arith.constant 0 : i32
    return %c0_i32, %c0_i32_0 : i32, i32
  }
  func.func @transform_3(%arg0: i32) -> (i32, i32) {
    %c0_i32 = arith.constant 0 : i32
    %c0_i32_0 = arith.constant 0 : i32
    return %arg0, %c0_i32 : i32, i32
  }
}

</mosaic_0001>

<llo_original>
// kernel: tile.8
$region0: #{tile.8}
  #allocation0 [shape = 's32[1]{0}', space=sflag, size = 0x4, scoped, tag = 'scoped memory for tile.8']
  %s0 = inlined_call_operand.vmem [shape: f32[8], index: 0, kind: input, shape index: {}]
  %s1 = inlined_call_operand.vmem [shape: f32[16,8], index: 1, kind: output, shape index: {}]
  // Predicated region
  $region2: #{tile.8} parent=0 // pred_check
    _
  $region3: #{tile.8} parent=0 // pred_check_branch
    %3 = sbr.rel (0) target = $region5
  $region4: #{tile.8} parent=0 // pred_region
    _
  $region5: #{tile.8} parent=0 // pred_fallthru
    _
  %v4 = vld [vmem:[%s0] ss:$0 sm:$0xff]
  %5 = vst [vmem:[%s1] sm:$0xff] %v4
  %s6 = scalar_lea.vmem %s1, 8
  %7 = vst [vmem:[%s6] sm:$0xff] %v4

// kernel: tile.9
$region0: #{tile.9}
  %s0 = inlined_call_operand.vmem [shape: f32[16,8], index: 0, kind: input, shape index: {}]
  %s1 = inlined_call_operand.vmem [shape: f32[1,128], index: 1, kind: output, shape index: {}]
  $region1: #{tile.9} parent=0
    #allocation0 [shape = 'u8[4096]{0}', space=vmem, size = 0x1000, scoped, tag = 'scoped mem for output reshape']
    %v2 = vld [vmem:[%s0] sm:$0x1]
    %vm3 = vcmask 64512
    %4 = vst.msk [vmem:[#allocation0] sm:$0x1] %vm3, %v2
    %s5 = scalar_lea.vmem %s0, 15
    %v6 = vld [vmem:[%s5] sm:$0x1]
    %7 = vrot.lane.b32.xlu0 %v6, 120
    %v8 = vpop.permute.xlu0 %7
    %vm9 = vcmask 1048512
    %10 = vst.msk [vmem:[#allocation0] sm:$0x1] %vm9, %v8
    %s11 = scalar_lea.vmem %s0, 14
    %v12 = vld [vmem:[%s11] sm:$0x1]
    %13 = vrot.lane.b32.xlu0 %v12, 112
    %v14 = vpop.permute.xlu0 %13
    %vm15 = vcmask 982912
    %16 = vst.msk [vmem:[#allocation0] sm:$0x1] %vm15, %v14
    %s17 = scalar_lea.vmem %s0, 13
    %v18 = vld [vmem:[%s17] sm:$0x1]
    %19 = vrot.lane.b32.xlu0 %v18, 104
    %v20 = vpop.permute.xlu0 %19
    %vm21 = vcmask 917312
    %22 = vst.msk [vmem:[#allocation0] sm:$0x1] %vm21, %v20
    %s23 = scalar_lea.vmem %s0, 12
    %v24 = vld [vmem:[%s23] sm:$0x1]
    %25 = vrot.lane.b32.xlu0 %v24, 96
    %v26 = vpop.permute.xlu0 %25
    %vm27 = vcmask 851712
    %28 = vst.msk [vmem:[#allocation0] sm:$0x1] %vm27, %v26
    %s29 = scalar_lea.vmem %s0, 11
    %v30 = vld [vmem:[%s29] sm:$0x1]
    %31 = vrot.lane.b32.xlu0 %v30, 88
    %v32 = vpop.permute.xlu0 %31
    %vm33 = vcmask 786112
    %34 = vst.msk [vmem:[#allocation0] sm:$0x1] %vm33, %v32
    %s35 = scalar_lea.vmem %s0, 10
    %v36 = vld [vmem:[%s35] sm:$0x1]
    %37 = vrot.lane.b32.xlu0 %v36, 80
    %v38 = vpop.permute.xlu0 %37
    %vm39 = vcmask 720512
    %40 = vst.msk [vmem:[#allocation0] sm:$0x1] %vm39, %v38
    %s41 = scalar_lea.vmem %s0, 9
    %v42 = vld [vmem:[%s41] sm:$0x1]
    %43 = vrot.lane.b32.xlu0 %v42, 72
    %v44 = vpop.permute.xlu0 %43
    %vm45 = vcmask 654912
    %46 = vst.msk [vmem:[#allocation0] sm:$0x1] %vm45, %v44
    %s47 = scalar_lea.vmem %s0, 8
    %v48 = vld [vmem:[%s47] sm:$0x1]
    %49 = vrot.lane.b32.xlu0 %v48, 64
    %v50 = vpop.permute.xlu0 %49
    %vm51 = vcmask 589312
    %52 = vst.msk [vmem:[#allocation0] sm:$0x1] %vm51, %v50
    %s53 = scalar_lea.vmem %s0, 7
    %v54 = vld [vmem:[%s53] sm:$0x1]
    %55 = vrot.lane.b32.xlu0 %v54, 56
    %v56 = vpop.permute.xlu0 %55
    %vm57 = vcmask 523712
    %58 = vst.msk [vmem:[#allocation0] sm:$0x1] %vm57, %v56
    %s59 = scalar_lea.vmem %s0, 6
    %v60 = vld [vmem:[%s59] sm:$0x1]
    %61 = vrot.lane.b32.xlu0 %v60, 48
    %v62 = vpop.permute.xlu0 %61
    %vm63 = vcmask 458112
    %64 = vst.msk [vmem:[#allocation0] sm:$0x1] %vm63, %v62
    %s65 = scalar_lea.vmem %s0, 5
    %v66 = vld [vmem:[%s65] sm:$0x1]
    %67 = vrot.lane.b32.xlu0 %v66, 40
    %v68 = vpop.permute.xlu0 %67
    %vm69 = vcmask 392512
    %70 = vst.msk [vmem:[#allocation0] sm:$0x1] %vm69, %v68
    %s71 = scalar_lea.vmem %s0, 4
    %v72 = vld [vmem:[%s71] sm:$0x1]
    %73 = vrot.lane.b32.xlu0 %v72, 32
    %v74 = vpop.permute.xlu0 %73
    %vm75 = vcmask 326912
    %76 = vst.msk [vmem:[#allocation0] sm:$0x1] %vm75, %v74
    %s77 = scalar_lea.vmem %s0, 3
    %v78 = vld [vmem:[%s77] sm:$0x1]
    %79 = vrot.lane.b32.xlu0 %v78, 24
    %v80 = vpop.permute.xlu0 %79
    %vm81 = vcmask 261312
    %82 = vst.msk [vmem:[#allocation0] sm:$0x1] %vm81, %v80
    %s83 = scalar_lea.vmem %s0, 2
    %v84 = vld [vmem:[%s83] sm:$0x1]
    %85 = vrot.lane.b32.xlu0 %v84, 16
    %v86 = vpop.permute.xlu0 %85
    %vm87 = vcmask 195712
    %88 = vst.msk [vmem:[#allocation0] sm:$0x1] %vm87, %v86
    %s89 = scalar_lea.vmem %s0, 1
    %v90 = vld [vmem:[%s89] sm:$0x1]
    %91 = vrot.lane.b32.xlu0 %v90, 8
    %v92 = vpop.permute.xlu0 %91
    %vm93 = vcmask 130112
    %94 = vst.msk [vmem:[#allocation0] sm:$0x1] %vm93, %v92
    %s96 = sshllo.u32 0, 1
    %v98 = vld [vmem:[#allocation0] sm:%s96]
    %s99 = sshllo.u32 0, 1
    %100 = vst [vmem:[%s1] sm:%s99] %v98

// kernel: m_conv_forward.1
$region0: #{m_conv_forward.1}
  #allocation0 [shape = 'u32[]', space=smem, size = 0x4, offset = 0x4, fixed_abs, tag = 'smem constant byte address 0x4 - core index']
  #allocation1 [shape = 'u32[144,128]{1,0:T(1,128)}', space=vmem, size = 0x12000, scoped, tag = 'internal scratch']
  %s0 = inlined_call_operand.vmem [shape: bf16[32,192], index: 0, kind: input, shape index: {}]
  %s1 = inlined_call_operand.vmem [shape: bf16[192,128], index: 1, kind: input, shape index: {}]
  %s2 = inlined_call_operand.vmem [shape: f32[1,128], index: 2, kind: input, shape index: {}]
  %s3 = inlined_call_operand.vmem [shape: f32[32,128], index: 3, kind: output, shape index: {}]
  %s4 = sld [smem:[#allocation0]]
  $region22: #{m_conv_forward.1} parent=0
    _
  %s6 = ssub.s32 1, %s4
  %s7 = scalar_select 0, %s6, %s4
  // Predicated region
  $region2: #{m_conv_forward.1} parent=0 // pred_check
    _
  $region3: #{m_conv_forward.1} parent=0 // pred_check_branch
    %9 = sbr.rel (0) target = $region5
  $region4: #{m_conv_forward.1} parent=0 // pred_region
    _
  $region5: #{m_conv_forward.1} parent=0 // pred_fallthru
    _
  // Predicated region
  $region6: #{m_conv_forward.1} parent=0 // pred_check
    _
  $region7: #{m_conv_forward.1} parent=0 // pred_check_branch
    %11 = sbr.rel (0) target = $region9
  $region8: #{m_conv_forward.1} parent=0 // pred_region
    _
  $region9: #{m_conv_forward.1} parent=0 // pred_fallthru
    _
  // Predicated region
  $region10: #{m_conv_forward.1} parent=0 // pred_check
    _
  $region11: #{m_conv_forward.1} parent=0 // pred_check_branch
    %13 = sbr.rel (0) target = $region13
  $region12: #{m_conv_forward.1} parent=0 // pred_region
    _
  $region13: #{m_conv_forward.1} parent=0 // pred_fallthru
    _
  %v15 = vld [vmem:[%s0] sm:$0xff]
  %v16 = vld [vmem:[%s0 + $0x8] sm:$0xff]
  %v17 = vld [vmem:[%s0 + $0x10] sm:$0xff]
  %v18 = vld [vmem:[%s0 + $0x18] sm:$0xff]
  %v19 = vld [vmem:[%s1] sm:$0xf]
  %v20 = vld [vmem:[%s1 + $0x4] sm:$0xf]
  %v21 = vld [vmem:[%s1 + $0x8] sm:$0xf]
  %v22 = vld [vmem:[%s1 + $0xc] sm:$0xf]
  %v23 = vld [vmem:[%s1 + $0x10] sm:$0xf]
  %v24 = vld [vmem:[%s1 + $0x14] sm:$0xf]
  %v25 = vld [vmem:[%s1 + $0x18] sm:$0xf]
  %v26 = vld [vmem:[%s1 + $0x1c] sm:$0xf]
  %v27 = vld [vmem:[%s1 + $0x20] sm:$0xf]
  %v28 = vld [vmem:[%s1 + $0x24] sm:$0xf]
  %v29 = vld [vmem:[%s1 + $0x28] sm:$0xf]
  %v30 = vld [vmem:[%s1 + $0x2c] sm:$0xf]
  %v31 = vld [vmem:[%s1 + $0x30] sm:$0xf]
  %v32 = vld [vmem:[%s1 + $0x34] sm:$0xf]
  %v33 = vld [vmem:[%s1 + $0x38] sm:$0xf]
  %v34 = vld [vmem:[%s1 + $0x3c] sm:$0xf]
  %v35 = vld [vmem:[%s1 + $0x40] sm:$0xf]
  %v36 = vld [vmem:[%s1 + $0x44] sm:$0xf]
  %v37 = vld [vmem:[%s1 + $0x48] sm:$0xf]
  %v38 = vld [vmem:[%s1 + $0x4c] sm:$0xf]
  %v39 = vld [vmem:[%s1 + $0x50] sm:$0xf]
  %v40 = vld [vmem:[%s1 + $0x54] sm:$0xf]
  %v41 = vld [vmem:[%s1 + $0x58] sm:$0xf]
  %v42 = vld [vmem:[%s1 + $0x5c] sm:$0xf]
  %v43 = vld [vmem:[%s2] sm:$0x1]
  %v45 = vlaneseq
  %v46 = vshrl.u32 %v45, 7
  %v47 = vsub.s32 0, %v46
  %v48 = vrot.slane %v43, %v47
  %v54 = vunpack.c.l.b16 %v15
  %v55 = vunpack.c.h.b16 %v15
  %v56 = vunpack.c.l.b16 %v16
  %v57 = vunpack.c.h.b16 %v16
  %v58 = vunpack.c.l.b16 %v17
  %v59 = vunpack.c.h.b16 %v17
  %v60 = vunpack.c.l.b16 %v18
  %v61 = vunpack.c.h.b16 %v18
  %v62 = vpack.c.b16 %v56, %v54
  %v63 = vpack.c.b16 %v57, %v55
  %v64 = vpack.c.b16 %v60, %v58
  %v65 = vpack.c.b16 %v61, %v59
  %v92 = vunpack.c.l.b16 %v19
  %v93 = vunpack.c.l.b16 %v20
  %v94 = vunpack.c.l.b16 %v21
  %v95 = vunpack.c.l.b16 %v22
  %v96 = vunpack.c.l.b16 %v23
  %v97 = vunpack.c.l.b16 %v24
  %v98 = vunpack.c.l.b16 %v25
  %v99 = vunpack.c.l.b16 %v26
  %v100 = vunpack.c.l.b16 %v27
  %v101 = vunpack.c.l.b16 %v28
  %v102 = vunpack.c.l.b16 %v29
  %v103 = vunpack.c.l.b16 %v30
  %v104 = vunpack.c.l.b16 %v31
  %v105 = vunpack.c.l.b16 %v32
  %v106 = vunpack.c.l.b16 %v33
  %v107 = vunpack.c.l.b16 %v34
  %v108 = vunpack.c.l.b16 %v35
  %v109 = vunpack.c.l.b16 %v36
  %v110 = vunpack.c.l.b16 %v37
  %v111 = vunpack.c.l.b16 %v38
  %v112 = vunpack.c.l.b16 %v39
  %v113 = vunpack.c.l.b16 %v40
  %v114 = vunpack.c.l.b16 %v41
  %v115 = vunpack.c.l.b16 %v42
  %v116 = vpack.c.b16 %v93, %v92
  %v117 = vpack.c.b16 %v95, %v94
  %v118 = vpack.c.b16 %v97, %v96
  %v119 = vpack.c.b16 %v99, %v98
  %v120 = vpack.c.b16 %v101, %v100
  %v121 = vpack.c.b16 %v103, %v102
  %v122 = vpack.c.b16 %v105, %v104
  %v123 = vpack.c.b16 %v107, %v106
  %v124 = vpack.c.b16 %v109, %v108
  %v125 = vpack.c.b16 %v111, %v110
  %v126 = vpack.c.b16 %v113, %v112
  %v127 = vpack.c.b16 %v115, %v114
  %vm140 = vcmask 523264
  %v142 = vsel %vm140, %v63, 0
  %v145 = vsel %vm140, %v65, 0
  %147 = vmatprep.subr.bf16.mxu0 0
  %148 = vmatpush1.bf16.msra.mxu0 %v116
  %149 = vmatprep.subr.bf16.mxu0 0
  %150 = vmatpush1.bf16.msra.mxu0 %v117
  %151 = vmatprep.subr.bf16.mxu0 0
  %152 = vmatpush1.bf16.msra.mxu0 %v118
  %153 = vmatprep.subr.bf16.mxu0 0
  %154 = vmatpush1.bf16.msra.mxu0 %v119
  %155 = vmatprep.subr.bf16.mxu0 0
  %156 = vmatpush1.bf16.msra.mxu0 %v120
  %157 = vmatprep.subr.bf16.mxu0 0
  %158 = vmatpush1.bf16.msra.mxu0 %v121
  %159 = vmatprep.subr.bf16.mxu0 0
  %160 = vmatpush1.bf16.msra.mxu0 %v122
  %161 = vmatprep.subr.bf16.mxu0 0
  %162 = vmatpush1.bf16.msra.mxu0 %v123
  %163 = vmatprep.subr.bf16.mxu0 0
  %164 = vmatpush1.bf16.msra.mxu0 %v124
  %165 = vmatprep.subr.bf16.mxu0 0
  %166 = vmatpush1.bf16.msra.mxu0 %v125
  %167 = vmatprep.subr.bf16.mxu0 0
  %168 = vmatpush1.bf16.msra.mxu0 %v126
  %169 = vmatprep.subr.bf16.mxu0 0
  %170 = vmatpush1.bf16.msra.mxu0 %v127
  %171 = vmatprep.subr.bf16.mxu0 0
  %172 = vmatpush1.bf16.msra.mxu0 0
  %173 = vmatprep.subr.bf16.mxu0 0
  %174 = vmatpush1.bf16.msra.mxu0 0
  %175 = vmatprep.subr.bf16.mxu0 0
  %176 = vmatpush1.bf16.msra.mxu0 0
  %177 = vmatprep.subr.bf16.mxu0 0
  %178 = vmatpush1.bf16.msra.mxu0 0
  %179 = vmatprep.mubr.bf16.mxu0 %v142
  %180 = vmatmul.mubr.bf16.gmra.mrb[0].mxu0 %v62
  %v181 = vpop.f32.mrb[0].mxu0
  %v182 = vadd.f32 %v48, %v181
  %v183 = vpop.f32.mrb[0].mxu0
  %v184 = vpop.f32.mrb[0].mxu0
  %v185 = vadd.f32 %v48, %v184
  %v186 = vpop.f32.mrb[0].mxu0
  %187 = vmatprep.mubr.bf16.mxu0 %v145
  %188 = vmatmul.mubr.bf16.gmra.mrb[0].mxu0 %v64
  %v189 = vpop.f32.mrb[0].mxu0
  %v190 = vadd.f32 %v48, %v189
  %v191 = vpop.f32.mrb[0].mxu0
  %v192 = vpop.f32.mrb[0].mxu0
  %v193 = vadd.f32 %v48, %v192
  %v194 = vpop.f32.mrb[0].mxu0
  %195 = vdwg.mxu0
  %v196 = vmax.f32 %v182, 0.0
  %v197 = vmax.f32 %v185, 0.0
  %v198 = vmax.f32 %v190, 0.0
  %v199 = vmax.f32 %v193, 0.0
  %v200 = vmin.f32 %v196, 6.0
  %v201 = vmin.f32 %v197, 6.0
  %v202 = vmin.f32 %v198, 6.0
  %v203 = vmin.f32 %v199, 6.0
  %204 = vst [vmem:[%s3] sm:$0xff] %v200
  %205 = vst [vmem:[%s3 + $0x8] sm:$0xff] %v201
  %206 = vst [vmem:[%s3 + $0x10] sm:$0xff] %v202
  %207 = vst [vmem:[%s3 + $0x18] sm:$0xff] %v203
  // Predicated region
  $region14: #{m_conv_forward.1} parent=0 // pred_check
    _
  $region15: #{m_conv_forward.1} parent=0 // pred_check_branch
    %209 = sbr.rel (0) target = $region17
  $region16: #{m_conv_forward.1} parent=0 // pred_region
    _
  $region17: #{m_conv_forward.1} parent=0 // pred_fallthru
    _
  // Predicated region
  $region18: #{m_conv_forward.1} parent=0 // pred_check
    _
  $region19: #{m_conv_forward.1} parent=0 // pred_check_branch
    %211 = sbr.rel (0) target = $region21
  $region20: #{m_conv_forward.1} parent=0 // pred_region
    _
  $region21: #{m_conv_forward.1} parent=0 // pred_fallthru
    _

</llo_original>
